<compile_context>
chip_gen: v6e
topology: v6e:2x2x1
jax: 0.10.0
libtpu: 0.0.40
codegen_flags: <defaults>
</compile_context>

<pallas_src>
import jax
import jax.numpy as jnp
from jax import lax
from jax.experimental import pallas as pl
from jax.experimental.pallas import tpu as pltpu


# --------------------------------------------------------------------------- #
# Prologue: row-wise L2 normalization + cast (memory-bound, one pass over HBM) #
# --------------------------------------------------------------------------- #
def _l2_normalize_kernel(x_ref, o_ref):
    eps_sq = jnp.float32(1e-24)  # (1e-12)^2 — matches F.normalize's eps guard
    x = x_ref[...].astype(jnp.float32)
    ssq = jnp.sum(x * x, axis=-1, keepdims=True)
    o_ref[...] = (x * lax.rsqrt(jnp.maximum(ssq, eps_sq))).astype(o_ref.dtype)


def _pick_tile(b, candidates):
    for t in candidates:
        if b % t == 0:
            return t
    return b  # fall back to the whole batch (block == full array is always legal)


def _l2_normalize(x, out_dtype):
    b, d = x.shape
    tr = _pick_tile(b, (512, 256, 128, 64, 32, 16, 8))
    return pl.pallas_call(
        _l2_normalize_kernel,
        out_shape=jax.ShapeDtypeStruct((b, d), out_dtype),
        grid_spec=pltpu.PrefetchScalarGridSpec(
            num_scalar_prefetch=0,
            grid=(b // tr,),
            in_specs=[pl.BlockSpec((tr, d), lambda i: (i, 0))],
            out_specs=pl.BlockSpec((tr, d), lambda i: (i, 0)),
        ),
        compiler_params=pltpu.CompilerParams(dimension_semantics=("parallel",)),
    )(x)


# --------------------------------------------------------------------------- #
# Main kernel: tiled logits + online logsumexp + masked diagonal extraction    #
# --------------------------------------------------------------------------- #
def _contrastive_lse_kernel(temp_ref, text_ref, img_ref, loss_ref,
                            m_sc, l_sc, diag_sc):
    qi = pl.program_id(0)
    ki = pl.program_id(1)
    tq = text_ref.shape[0]
    tk = img_ref.shape[0]

    # --- per-q-block init ------------------------------------------------------
    @pl.when(ki == 0)
    def _init():
        m_sc[...] = jnp.full_like(m_sc, -jnp.inf)
        l_sc[...] = jnp.zeros_like(l_sc)
        diag_sc[...] = jnp.zeros_like(diag_sc)

    # --- similarity block: (tq, D) x (tk, D) contracted on minor dims (no .T) ---
    # Operands are already normalized (and possibly bf16); accumulate in f32 on the
    # MXU, then apply 1/temperature to the f32 logits (keeps the positive logit from
    # being bf16-rounded a second time).
    inv_temp = jnp.float32(1.0) / temp_ref[0]
    s = lax.dot_general(text_ref[...], img_ref[...], (((1,), (1,)), ((), ())),
                        preferred_element_type=jnp.float32) * inv_temp  # (tq, tk) f32

    # --- online logsumexp update -------------------------------------------------
    m_prev = m_sc[...]
    m_new = jnp.maximum(m_prev, jnp.max(s, axis=-1, keepdims=True))
    alpha = jnp.exp(m_prev - m_new)
    l_sc[...] = alpha * l_sc[...] + jnp.sum(jnp.exp(s - m_new), axis=-1, keepdims=True)
    m_sc[...] = m_new

    # --- positive (diagonal) logit: masked extraction from the MXU result --------
    # Global row = qi*tq + i, global col = ki*tk + j; diagonal when j == i + off.
    off = qi * tq - ki * tk
    @pl.when((off > -tq) & (off < tk))
    def _diag():
        row = lax.broadcasted_iota(jnp.int32, (tq, tk), 0)
        col = lax.broadcasted_iota(jnp.int32, (tq, tk), 1)
        hit = col == row + off
        diag_sc[...] += jnp.sum(jnp.where(hit, s, 0.0), axis=-1, keepdims=True)

    # --- finalize: per-example cross-entropy = logsumexp - positive logit --------
    @pl.when(ki == pl.num_programs(1) - 1)
    def _finalize():
        loss_ref[...] = m_sc[...] + jnp.log(l_sc[...]) - diag_sc[...]


def _estimate_vmem_bytes(tq, tk, d, itemsize):
    # text q-block (double-buffered) + image k-block (double-buffered)
    # + f32 logits / exp temporaries + per-row scratch & loss block.
    return (2 * tq * d * itemsize
            + 2 * tk * d * itemsize
            + 3 * tq * tk * 4
            + 8 * tq * 4)


# --------------------------------------------------------------------------- #
# Wrapper                                                                       #
# --------------------------------------------------------------------------- #
def contrastive_loss_with_learnable_temp(text_embeds, image_embeds, temperature,
                                         *, tq=None, tk=None, use_bf16_matmul=True):
    """Pallas equivalent of ContrastiveLossWithLearnableTemp.forward."""
    assert text_embeds.shape == image_embeds.shape
    b, d = text_embeds.shape
    compute_dtype = jnp.bfloat16 if use_bf16_matmul else jnp.float32
    itemsize = jnp.dtype(compute_dtype).itemsize

    # ---- prologue: normalize once, cast once (halves image-stream DMA for bf16) --
    text_n = _l2_normalize(text_embeds, compute_dtype)
    img_n = _l2_normalize(image_embeds, compute_dtype)

    # ---- tile selection -----------------------------------------------------------
    # tq large (amortizes the re-streamed image matrix), tk at MXU width.  On v5e
    # prefer tk=128 (4x128 MXU) and avoid tq=1024 (16 MiB default scoped VMEM).
    if tq is None:
        tq = _pick_tile(b, (512, 256, 128, 64, 32, 16, 8))
    if tk is None:
        if _estimate_vmem_bytes(tq, b, d, itemsize) <= (36 << 20):
            tk = b  # fully VMEM-resident image matrix: constant index_map, loaded once
        else:
            tk = _pick_tile(b, (256, 128, 64, 32, 16, 8))
    assert b % tq == 0 and b % tk == 0, "batch must be divisible by the tile sizes"
    n_qblk, n_kblk = b // tq, b // tk

    # ---- VMEM budget (v7x: 64 MiB physical / 32 MiB default scoped; v5e default 16) -
    est = _estimate_vmem_bytes(tq, tk, d, itemsize)
    vmem_limit = int(min(max(est + (12 << 20), 32 << 20), 48 << 20))

    temp = jnp.asarray(temperature, jnp.float32).reshape(1)

    per_example = pl.pallas_call(
        _contrastive_lse_kernel,
        out_shape=jax.ShapeDtypeStruct((b, 1), jnp.float32),
        grid_spec=pltpu.PrefetchScalarGridSpec(
            num_scalar_prefetch=0,
            grid=(n_qblk, n_kblk),  # reduction (k) axis last
            in_specs=[
                pl.BlockSpec(memory_space=pltpu.MemorySpace.SMEM),        # temperature (1,)
                pl.BlockSpec((tq, d), lambda qi, ki: (qi, 0)),            # text block
                pl.BlockSpec((tk, d), lambda qi, ki: (ki, 0)),            # image block
            ],
            out_specs=pl.BlockSpec((tq, 1), lambda qi, ki: (qi, 0)),      # per-example loss
            scratch_shapes=[
                pltpu.VMEM((tq, 1), jnp.float32),   # running max m
                pltpu.VMEM((tq, 1), jnp.float32),   # running sum l
                pltpu.VMEM((tq, 1), jnp.float32),   # positive (diagonal) logits
            ],
        ),
        compiler_params=pltpu.CompilerParams(
            dimension_semantics=("parallel", "arbitrary"),
            vmem_limit_bytes=vmem_limit),
    )(temp, text_n, img_n)

    # F.cross_entropy default 'mean' reduction — tiny final reduce in the wrapper.
    return jnp.mean(per_example)


# --------------------------------------------------------------------------- #
# Self-test                                                                     #
# --------------------------------------------------------------------------- #
if __name__ == "__main__":
    temperature = jnp.float32(0.1)  # nn.Parameter(torch.tensor(0.1))
    key = jax.random.PRNGKey(0)
    k1, k2, k3, k4 = jax.random.split(key, 4)

    def reference(t, v, temp):
        t_n = t / jnp.maximum(jnp.linalg.norm(t, axis=-1, keepdims=True), 1e-12)
        v_n = v / jnp.maximum(jnp.linalg.norm(v, axis=-1, keepdims=True), 1e-12)
        logits = (t_n @ v_n.T) / temp
        return jnp.mean(jax.scipy.special.logsumexp(logits, axis=-1)
                        - jnp.diagonal(logits))

    # Case 1: toy shapes implied by the module (batch=8, hidden=32), exact f32 path,
    # default tiles (fully VMEM-resident image path, single k block).
    t_small = jax.random.normal(k1, (8, 32), dtype=jnp.float32)
    v_small = jax.random.normal(k2, (8, 32), dtype=jnp.float32)
    loss_f32 = contrastive_loss_with_learnable_temp(
        t_small, v_small, temperature, use_bf16_matmul=False)
    jax.block_until_ready(loss_f32)
    ref_small = reference(t_small, v_small, temperature)
    assert jnp.allclose(loss_f32, ref_small, rtol=1e-3, atol=1e-5), (loss_f32, ref_small)

    # Case 2: multi-block grid with online logsumexp (square tiles).
    t_big = jax.random.normal(k3, (32, 128), dtype=jnp.float32)
    v_big = jax.random.normal(k4, (32, 128), dtype=jnp.float32)
    ref_big = reference(t_big, v_big, temperature)

    loss_sq = contrastive_loss_with_learnable_temp(
        t_big, v_big, temperature, tq=8, tk=8, use_bf16_matmul=False)
    jax.block_until_ready(loss_sq)
    assert jnp.allclose(loss_sq, ref_big, rtol=1e-3, atol=1e-5), (loss_sq, ref_big)

    # Case 3: decoupled tiles (tq != tk) — diagonal spans multiple k blocks.
    loss_rect = contrastive_loss_with_learnable_temp(
        t_big, v_big, temperature, tq=16, tk=8, use_bf16_matmul=False)
    jax.block_until_ready(loss_rect)
    assert jnp.allclose(loss_rect, ref_big, rtol=1e-3, atol=1e-5), (loss_rect, ref_big)

    # Case 4: bf16-operand MXU path (f32 accumulation, f32 temperature scaling).
    loss_bf16 = contrastive_loss_with_learnable_temp(
        t_big, v_big, temperature, use_bf16_matmul=True)
    jax.block_until_ready(loss_bf16)
    assert jnp.allclose(loss_bf16, ref_big, rtol=5e-2, atol=5e-2), (loss_bf16, ref_big)

    print("KERNEL_OK")
</pallas_src>

<mosaic_0001>
module attributes {stable_mosaic.version = 11 : i64} {
  func.func @_l2_normalize_kernel(%arg0: i32, %arg1: memref<8x32xf32, #tpu.memory_space<vmem>>, %arg2: memref<8x32xf32, #tpu.memory_space<vmem>>) attributes {dimension_semantics = [#tpu.dimension_semantics<parallel>], iteration_bounds = array<i64: 1>, scalar_prefetch = 0 : i64, scratch_operands = 0 : i64, tpu.core_type = #tpu.core_type<tc>, window_params = [{transform_indices = @transform_0, window_bounds = array<i64: 8, 32>}, {transform_indices = @transform_1, window_bounds = array<i64: 8, 32>}]} {
    %c0 = arith.constant 0 : index
    %c0_0 = arith.constant 0 : index
    %0 = vector.load %arg1[%c0, %c0_0] : memref<8x32xf32, #tpu.memory_space<vmem>>, vector<8x32xf32>
    %1 = arith.mulf %0, %0 : vector<8x32xf32>
    %cst = arith.constant dense<0.000000e+00> : vector<8xf32>
    %2 = vector.multi_reduction <add>, %1, %cst [1] : vector<8x32xf32> to vector<8xf32>
    %3 = vector.shape_cast %2 : vector<8xf32> to vector<8x1xf32>
    %cst_1 = arith.constant 1.000000e-24 : f32
    %4 = vector.broadcast %cst_1 : f32 to vector<8x1xf32>
    %5 = arith.maximumf %3, %4 : vector<8x1xf32>
    %6 = math.rsqrt %5 : vector<8x1xf32>
    %7 = vector.broadcast %6 : vector<8x1xf32> to vector<8x32xf32>
    %8 = arith.mulf %0, %7 : vector<8x32xf32>
    %c0_2 = arith.constant 0 : index
    %c0_3 = arith.constant 0 : index
    %9 = vector.load %arg2[%c0_2, %c0_3] : memref<8x32xf32, #tpu.memory_space<vmem>>, vector<8x32xf32>
    tpu.vector_store %arg2[%c0_2, %c0_3], %8 {strides = array<i32>} : memref<8x32xf32, #tpu.memory_space<vmem>>, vector<8x32xf32>,
    return
  }
  func.func @transform_0(%arg0: i32) -> (i32, i32) {
    %c0_i32 = arith.constant 0 : i32
    %c0_i32_0 = arith.constant 0 : i32
    return %arg0, %c0_i32 : i32, i32
  }
  func.func @transform_1(%arg0: i32) -> (i32, i32) {
    %c0_i32 = arith.constant 0 : i32
    %c0_i32_0 = arith.constant 0 : i32
    return %arg0, %c0_i32 : i32, i32
  }
}

</mosaic_0001>

<llo_original>
// kernel: tpu_custom_call.1
$region0: #{tpu_custom_call.1}
  #allocation0 [shape = 'u32[]', space=smem, size = 0x4, offset = 0x4, fixed_abs, tag = 'smem constant byte address 0x4 - core index']
  #allocation1 [shape = 'u32[144,128]{1,0:T(1,128)}', space=vmem, size = 0x12000, scoped, tag = 'internal scratch']
  %s0 = inlined_call_operand.hbm [shape: f32[8,32], index: 0, kind: input, shape index: {}]
  %s1 = inlined_call_operand.hbm [shape: f32[8,32], index: 1, kind: output, shape index: {}]
  %s2 = sld [smem:[#allocation0]]
  $region18: #{tpu_custom_call.1} parent=0
    _
  %s4 = ssub.s32 1, %s2
  %s5 = scalar_select 0, %s4, %s2
  $region1: #{tpu_custom_call.1} parent=0
    #allocation2 [shape = 'u8[4096]{0}', space=vmem, size = 0x1000, scoped, tag = 'input window, operand 0, single buffered']
    #allocation3 [shape = 's32[1]{0}', space=sflag, size = 0x4, scoped, tag = 'scoped memory for tpu_custom_call.1']
    #allocation4 [shape = 's32[1]{0}', space=sflag, size = 0x4, scoped, tag = 'scoped memory for tpu_custom_call.1']
    #allocation5 [shape = 'u8[4096]{0}', space=vmem, size = 0x1000, scoped, tag = 'output window, operand 0, single buffered']
    %6 = vsyncpa [#allocation3], 0
    %7 = vsyncpa [#allocation4], 0
    // Predicated region
    $region2: #{tpu_custom_call.1} parent=1 // pred_check
      _
    $region3: #{tpu_custom_call.1} parent=1 // pred_check_branch
      %9 = sbr.rel (0) target = $region5
    $region4: #{tpu_custom_call.1} parent=1 // pred_region
      %s11 = ssub.s32 128, 128
      %12 = vsyncadd [#allocation3], %s11
      %s14 = sshll.u32 [#allocation2], 4
      %s15 = int_to_ptr.vmem [resolvable:$true] %s14
      %17 = dma.hbm_to_vmem [thread:$0]  %s0, 128, %s15, [#allocation3]
    $region5: #{tpu_custom_call.1} parent=1 // pred_fallthru
      _
    // Predicated region
    $region6: #{tpu_custom_call.1} parent=1 // pred_check
      _
    $region7: #{tpu_custom_call.1} parent=1 // pred_check_branch
      %19 = sbr.rel (0) target = $region9
    $region8: #{tpu_custom_call.1} parent=1 // pred_region
      %20 = dma.done [#allocation3], 128
    $region9: #{tpu_custom_call.1} parent=1 // pred_fallthru
      _
    %v21 = vld [vmem:[#allocation2] sm:$0xff]
    %v22 = vmul.f32 %v21, %v21
    %vm23 = vcmask 261120
    %v24 = vsel %vm23, %v22, 0.0
    %25 = vadd.xlane.f32.xlu0 %v24
    %v26 = vpop.xlane.xlu0 %25
    %v27 = vmax.f32 %v26, 1e-24
    %v28 = vrsqrt.pop %v27
    %v29 = vmul.f32 %v21, %v28
    %30 = vst.msk [vmem:[#allocation5] sm:$0xff] %vm23, %v29
    // Predicated region
    $region10: #{tpu_custom_call.1} parent=1 // pred_check
      _
    $region11: #{tpu_custom_call.1} parent=1 // pred_check_branch
      %32 = sbr.rel (0) target = $region13
    $region12: #{tpu_custom_call.1} parent=1 // pred_region
      %s34 = ssub.s32 128, 128
      %35 = vsyncadd [#allocation4], %s34
      %s37 = sshll.u32 [#allocation5], 4
      %s38 = int_to_ptr.vmem [resolvable:$true] %s37
      %40 = dma.vmem_to_hbm [thread:$0]  %s38, 128, %s1, [#allocation4]
    $region13: #{tpu_custom_call.1} parent=1 // pred_fallthru
      _
    // Predicated region
    $region14: #{tpu_custom_call.1} parent=1 // pred_check
      _
    $region15: #{tpu_custom_call.1} parent=1 // pred_check_branch
      %42 = sbr.rel (0) target = $region17
    $region16: #{tpu_custom_call.1} parent=1 // pred_region
      %43 = dma.done [#allocation4], 128
    $region17: #{tpu_custom_call.1} parent=1 // pred_fallthru
      _
    %44 = vsyncpa [#allocation3], 1
    %45 = vsyncpa [#allocation4], 1

</llo_original>
